<compile_context>
chip_gen: v7x
topology: tpu7x:2x2x1
jax: 0.10.0
libtpu: 0.0.40
codegen_flags: <defaults>
</compile_context>

<pallas_src>
import jax
import jax.numpy as jnp
from jax.experimental import pallas as pl
from jax.experimental.pallas import tpu as pltpu

SUBLANE_F32 = 8    # f32 sublane tiling unit
SUBLANE_BF16 = 16  # bf16 sublane packing
OUT_PAD = 8        # padded output width (5 -> 8): full-array last dim, cheap vst


def _round_up(n: int, m: int) -> int:
    return ((n + m - 1) // m) * m


# --------------------------------------------------------------------------
# Kernel: one fused affine + ReLU on a (tile_b, D) x (D, OUT_PAD) tile.
# --------------------------------------------------------------------------
def folded_mlp_kernel(x_ref, w_ref, b_ref, o_ref):
    # Cast x to the weight's compute dtype in-kernel (free; hidden under DMA).
    x = x_ref[...].astype(w_ref.dtype)
    y = jnp.dot(x, w_ref[...], preferred_element_type=jnp.float32) + b_ref[...]
    o_ref[...] = jnp.maximum(y, 0.0).astype(o_ref.dtype)


# --------------------------------------------------------------------------
# Parameter folding (done once per parameter set, outside the kernel).
# --------------------------------------------------------------------------
def fold_params(params, compute_dtype=jnp.float32):
    """Collapse fc1->fc2->fc3 into one affine map, padded to OUT_PAD columns.

    compute_dtype=jnp.bfloat16 halves Wc (and in-kernel x) vreg bytes on every
    generation (v5e/v6e/v7x MXUs are all bf16-native); accumulation stays f32.
    Note: folding then quantizing Wc to bf16 quantizes the composed weight
    once, so bf16 results differ slightly more from the unfused reference than
    a per-layer bf16 implementation would.
    """
    w1, b1 = params["w1"], params["b1"]
    w2, b2 = params["w2"], params["b2"]
    w3, b3 = params["w3"], params["b3"]

    wc = w1 @ w2 @ w3                      # [D, 5]
    bc = (b1 @ w2 + b2) @ w3 + b3          # [1, 5]

    out_features = wc.shape[1]
    n_pad = _round_up(out_features, OUT_PAD)   # 5 -> 8
    wc = jnp.pad(wc, ((0, 0), (0, n_pad - out_features)))
    bc = jnp.pad(bc, ((0, 0), (0, n_pad - out_features)))

    return {
        "wc": wc.astype(compute_dtype),
        "bc": bc.astype(jnp.float32),      # bias added post-accumulation in f32
        "out_features": out_features,
    }


def _choose_tile_b(B: int, rounding: int) -> int:
    # Big tiles amortize the ~0.35 us/step grid overhead; splitting into >= 2
    # tiles keeps both v7x TensorCores busy on mid-size batches.
    cap = 8192                                  # ~2 MiB of f32 x at D=64 per buffer
    half = _round_up(pl.cdiv(B, 2), rounding)
    return max(rounding, min(cap, half))


# --------------------------------------------------------------------------
# Forward pass.
# --------------------------------------------------------------------------
def net_forward(x, folded, *, tile_b=None):
    """x: [B, input_size]; folded: result of fold_params(params)."""
    wc, bc = folded["wc"], folded["bc"]
    out_features = folded["out_features"]

    B, D = x.shape
    N = wc.shape[1]                        # OUT_PAD (8)

    rounding = SUBLANE_BF16 if x.dtype == jnp.bfloat16 else SUBLANE_F32
    if tile_b is None:
        tile_b = _choose_tile_b(B, rounding)
    tile_b = _round_up(tile_b, rounding)

    grid = (pl.cdiv(B, tile_b),)           # no jnp.pad of x: Pallas handles the
                                           # ragged trailing block; garbage rows
                                           # are clipped on store / sliced below.

    out = pl.pallas_call(
        folded_mlp_kernel,
        out_shape=jax.ShapeDtypeStruct((B, N), x.dtype),
        grid_spec=pltpu.PrefetchScalarGridSpec(
            num_scalar_prefetch=0,
            grid=grid,
            in_specs=[
                # x streams per batch tile (stays in its HBM dtype; cast in-kernel).
                pl.BlockSpec((tile_b, D), lambda i: (i, 0)),
                # Folded weight / bias: constant index_map -> fetched once,
                # resident in VMEM across all batch tiles.
                pl.BlockSpec((D, N), lambda i: (0, 0)),
                pl.BlockSpec((1, N), lambda i: (0, 0)),
            ],
            out_specs=pl.BlockSpec((tile_b, N), lambda i: (i, 0)),
        ),
        compiler_params=pltpu.CompilerParams(
            # Batch tiles are independent -> shard across v7x's 2 TensorCores.
            dimension_semantics=("parallel",),
            # Footprint even at tile_b=8192 is ~5 MiB double-buffered.
            vmem_limit_bytes=32 * 1024 * 1024,
        ),
    )(x, wc, bc)

    return out[:B, :out_features]


# --------------------------------------------------------------------------
# Parameter init mimicking PyTorch nn.Linear defaults (U[-1/sqrt(fan_in), +]).
# Weights stored as [in_features, out_features] (transpose of PyTorch layout).
# --------------------------------------------------------------------------
def init_params(key, input_size):
    dims = [(input_size, 128), (128, 32), (32, 5)]
    params = {}
    for i, (fan_in, fan_out) in enumerate(dims, start=1):
        key, kw, kb = jax.random.split(key, 3)
        bound = 1.0 / jnp.sqrt(float(fan_in))
        params[f"w{i}"] = jax.random.uniform(
            kw, (fan_in, fan_out), jnp.float32, -bound, bound)
        params[f"b{i}"] = jax.random.uniform(
            kb, (1, fan_out), jnp.float32, -bound, bound)
    return params


def reference_forward(x, params):
    """Unfused pure-JAX reference: exactly the PyTorch Net math."""
    h = x @ params["w1"] + params["b1"]
    h = h @ params["w2"] + params["b2"]
    return jnp.maximum(h @ params["w3"] + params["b3"], 0.0)


if __name__ == "__main__":
    key = jax.random.PRNGKey(0)
    key, kx = jax.random.split(key)

    batch = 20          # not a multiple of tile_b -> exercises the ragged block path
    input_size = 64
    x = jax.random.normal(kx, (batch, input_size), jnp.float32)
    params = init_params(key, input_size)
    ref = reference_forward(x, params)

    # f32 path (default): tight check against the original (unfused) math.
    folded_f32 = fold_params(params, compute_dtype=jnp.float32)
    y = net_forward(x, folded_f32)
    jax.block_until_ready(y)
    assert y.shape == (batch, 5)
    assert jnp.allclose(y, ref, atol=1e-4, rtol=1e-4)

    # bf16-MXU path (useful on v5e/v6e/v7x alike): same kernel, bf16 Wc and
    # in-kernel x cast, f32 accumulation; loose tolerance.
    folded_bf16 = fold_params(params, compute_dtype=jnp.bfloat16)
    y_bf16 = net_forward(x, folded_bf16)
    jax.block_until_ready(y_bf16)
    assert y_bf16.shape == (batch, 5)
    assert jnp.allclose(y_bf16, ref, atol=5e-2, rtol=5e-2)

    print("KERNEL_OK")
</pallas_src>

<mosaic_0001>
module attributes {stable_mosaic.version = 11 : i64} {
  func.func @folded_mlp_kernel(%arg0: i32, %arg1: memref<16x64xf32, #tpu.memory_space<vmem>>, %arg2: memref<64x8xf32, #tpu.memory_space<vmem>>, %arg3: memref<1x8xf32, #tpu.memory_space<vmem>>, %arg4: memref<16x8xf32, #tpu.memory_space<vmem>>) attributes {dimension_semantics = [#tpu.dimension_semantics<parallel>], iteration_bounds = array<i64: 2>, scalar_prefetch = 0 : i64, scratch_operands = 0 : i64, tpu.core_type = #tpu.core_type<tc>, window_params = [{transform_indices = @transform_0, window_bounds = array<i64: 16, 64>}, {pipeline_mode = #tpu.pipeline_mode<synchronous>, transform_indices = @transform_1, window_bounds = array<i64: 64, 8>}, {pipeline_mode = #tpu.pipeline_mode<synchronous>, transform_indices = @transform_2, window_bounds = array<i64: 1, 8>}, {transform_indices = @transform_3, window_bounds = array<i64: 16, 8>}]} {
    %c0 = arith.constant 0 : index
    %c0_0 = arith.constant 0 : index
    %0 = vector.load %arg1[%c0, %c0_0] : memref<16x64xf32, #tpu.memory_space<vmem>>, vector<16x64xf32>
    %c0_1 = arith.constant 0 : index
    %c0_2 = arith.constant 0 : index
    %1 = vector.load %arg2[%c0_1, %c0_2] : memref<64x8xf32, #tpu.memory_space<vmem>>, vector<64x8xf32>
    %cst = arith.constant dense<0.000000e+00> : vector<16x8xf32>
    %2 = tpu.matmul %0, %1, %cst {dimension_numbers = #tpu.dot_dimension_numbers<[1], [0], [0], [1], [0, 0, 1, 1], [], []>} : vector<16x64xf32>, vector<64x8xf32>, vector<16x8xf32> -> vector<16x8xf32>
    %c0_3 = arith.constant 0 : index
    %c0_4 = arith.constant 0 : index
    %3 = vector.load %arg3[%c0_3, %c0_4] : memref<1x8xf32, #tpu.memory_space<vmem>>, vector<1x8xf32>
    %4 = vector.broadcast %3 : vector<1x8xf32> to vector<16x8xf32>
    %5 = arith.addf %2, %4 : vector<16x8xf32>
    %cst_5 = arith.constant 0.000000e+00 : f32
    %6 = vector.broadcast %cst_5 : f32 to vector<16x8xf32>
    %7 = arith.maximumf %5, %6 : vector<16x8xf32>
    %c0_6 = arith.constant 0 : index
    %c0_7 = arith.constant 0 : index
    %8 = vector.load %arg4[%c0_6, %c0_7] : memref<16x8xf32, #tpu.memory_space<vmem>>, vector<16x8xf32>
    tpu.vector_store %arg4[%c0_6, %c0_7], %7 {strides = array<i32>} : memref<16x8xf32, #tpu.memory_space<vmem>>, vector<16x8xf32>,
    return
  }
  func.func @transform_0(%arg0: i32) -> (i32, i32) {
    %c0_i32 = arith.constant 0 : i32
    %c0_i32_0 = arith.constant 0 : i32
    return %arg0, %c0_i32 : i32, i32
  }
  func.func @transform_1(%arg0: i32) -> (i32, i32) {
    %c0_i32 = arith.constant 0 : i32
    %c0_i32_0 = arith.constant 0 : i32
    %c0_i32_1 = arith.constant 0 : i32
    return %c0_i32, %c0_i32_0 : i32, i32
  }
  func.func @transform_2(%arg0: i32) -> (i32, i32) {
    %c0_i32 = arith.constant 0 : i32
    %c0_i32_0 = arith.constant 0 : i32
    %c0_i32_1 = arith.constant 0 : i32
    return %c0_i32, %c0_i32_0 : i32, i32
  }
  func.func @transform_3(%arg0: i32) -> (i32, i32) {
    %c0_i32 = arith.constant 0 : i32
    %c0_i32_0 = arith.constant 0 : i32
    return %arg0, %c0_i32 : i32, i32
  }
}

</mosaic_0001>

<llo_original>
// kernel: tpu_custom_call.1
$region0: #{tpu_custom_call.1}
  #allocation0 [shape = 'u32[]', space=smem, size = 0x4, offset = 0x4, fixed_abs, tag = 'smem constant byte address 0x4 - core index']
  #allocation1 [shape = 'u32[144,128]{1,0:T(1,128)}', space=vmem, size = 0x12000, scoped, tag = 'internal scratch']
  %s0 = inlined_call_operand.vmem [shape: f32[20,64], index: 0, kind: input, shape index: {}]
  %s1 = inlined_call_operand.vmem [shape: f32[64,8], index: 1, kind: input, shape index: {}]
  %s2 = inlined_call_operand.vmem [shape: f32[1,8], index: 2, kind: input, shape index: {}]
  %s3 = inlined_call_operand.vmem [shape: f32[20,8], index: 3, kind: output, shape index: {}]
  %s4 = sld [smem:[#allocation0]]
  $region93: #{tpu_custom_call.1} parent=0
    _
  %s6 = ssub.s32 1, %s4
  %s7 = scalar_select 0, %s6, %s4
  $region1: #{tpu_custom_call.1} parent=0
    #allocation2 [shape = 'u8[16384]{0}', space=vmem, size = 0x4000, scoped, tag = 'output window, operand 0']
    loop: start=0, step=1, limit=4
    $region2: #{tpu_custom_call.1} parent=1 // loop_pre_header
      _
    $region3: #{tpu_custom_call.1} parent=1 // loop_header
      %s9 = sphi 0, %s13
      %p10 = scmp.ge.s32.totalorder %s9, 4
      %s19 = sphi 0, %s21
      %s22 = sphi 0, %s19
      %s23 = sphi 0, %s22
      %s39 = sphi 0, %s23
      %s43 = sphi 0, %s43
      %s45 = sphi 0, %s43
      %s46 = sphi 0, %s45
      %s60 = sphi 0, %s46
      %s64 = sphi 0, %s64
      %s66 = sphi 0, %s64
      %s67 = sphi 0, %s66
      %s81 = sphi 0, %s67
      %s87 = sphi 0, %s89
      %s90 = sphi 0, %s87
      %s91 = sphi 0, %s90
      %s107 = sphi 0, %s91
    $region4: #{tpu_custom_call.1} parent=1 // loop_header_branch
      %12 = sbr.rel (%p10) target = $region8
    $region5: #{tpu_custom_call.1} parent=1 // loop_body
      %s14 = ssub.s32 %s9, 1
      %s15 = ssub.s32 %s9, 2
      %s16 = sadd.s32 %s9, 1
      %s17 = ssub.s32 %s9, %s16
      %p18 = scmp.eq.s32.totalorder %s17, 0
      %s20 = sadd.s32 %s19, 1
      %s21 = scalar_select %p18, %s19, %s20
      %p24 = pneg %p18
      %p25 = scmp.eq.s32.totalorder %s9, 1
      %p26 = por %p24, %p25
      %p27 = scmp.ne.s32.totalorder %s19, %s22
      %p28 = scmp.eq.s32.totalorder %s9, 0
      %p29 = por %p27, %p28
      %p30 = scmp.ne.s32.totalorder %s19, %s22
      %p31 = scmp.eq.s32.totalorder %s14, 1
      %p32 = por %p30, %p31
      %p33 = scmp.ne.s32.totalorder %s22, %s23
      %p34 = scmp.eq.s32.totalorder %s14, 0
      %p35 = por %p33, %p34
      %p36 = scmp.ne.s32.totalorder %s22, %s23
      %p37 = scmp.eq.s32.totalorder %s15, 1
      %p38 = por %p36, %p37
      %p40 = scmp.ne.s32.totalorder %s23, %s39
      %p41 = scmp.eq.s32.totalorder %s15, 0
      %p42 = por %p40, %p41
      %s44 = sadd.s32 %s43, 1
      %p47 = scmp.eq.s32.totalorder %s9, 1
      %p48 = scmp.ne.s32.totalorder %s43, %s45
      %p49 = scmp.eq.s32.totalorder %s9, 0
      %p50 = por %p48, %p49
      %p51 = scmp.ne.s32.totalorder %s43, %s45
      %p52 = scmp.eq.s32.totalorder %s14, 1
      %p53 = por %p51, %p52
      %p54 = scmp.ne.s32.totalorder %s45, %s46
      %p55 = scmp.eq.s32.totalorder %s14, 0
      %p56 = por %p54, %p55
      %p57 = scmp.ne.s32.totalorder %s45, %s46
      %p58 = scmp.eq.s32.totalorder %s15, 1
      %p59 = por %p57, %p58
      %p61 = scmp.ne.s32.totalorder %s46, %s60
      %p62 = scmp.eq.s32.totalorder %s15, 0
      %p63 = por %p61, %p62
      %s65 = sadd.s32 %s64, 1
      %p68 = scmp.eq.s32.totalorder %s9, 1
      %p69 = scmp.ne.s32.totalorder %s64, %s66
      %p70 = scmp.eq.s32.totalorder %s9, 0
      %p71 = por %p69, %p70
      %p72 = scmp.ne.s32.totalorder %s64, %s66
      %p73 = scmp.eq.s32.totalorder %s14, 1
      %p74 = por %p72, %p73
      %p75 = scmp.ne.s32.totalorder %s66, %s67
      %p76 = scmp.eq.s32.totalorder %s14, 0
      %p77 = por %p75, %p76
      %p78 = scmp.ne.s32.totalorder %s66, %s67
      %p79 = scmp.eq.s32.totalorder %s15, 1
      %p80 = por %p78, %p79
      %p82 = scmp.ne.s32.totalorder %s67, %s81
      %p83 = scmp.eq.s32.totalorder %s15, 0
      %p84 = por %p82, %p83
      %s85 = ssub.s32 %s9, %s16
      %p86 = scmp.eq.s32.totalorder %s85, 0
      %s88 = sadd.s32 %s87, 1
      %s89 = scalar_select %p86, %s87, %s88
      %p92 = pneg %p86
      %p93 = scmp.eq.s32.totalorder %s9, 1
      %p94 = por %p92, %p93
      %p95 = scmp.ne.s32.totalorder %s87, %s90
      %p96 = scmp.eq.s32.totalorder %s9, 0
      %p97 = por %p95, %p96
      %p98 = scmp.ne.s32.totalorder %s87, %s90
      %p99 = scmp.eq.s32.totalorder %s14, 1
      %p100 = por %p98, %p99
      %p101 = scmp.ne.s32.totalorder %s90, %s91
      %p102 = scmp.eq.s32.totalorder %s14, 0
      %p103 = por %p101, %p102
      %p104 = scmp.ne.s32.totalorder %s90, %s91
      %p105 = scmp.eq.s32.totalorder %s15, 1
      %p106 = por %p104, %p105
      %p108 = scmp.ne.s32.totalorder %s91, %s107
      %p109 = scmp.eq.s32.totalorder %s15, 0
      %p110 = por %p108, %p109
      %p111 = scmp.le.s32.totalorder 1, %s9
      %p112 = scmp.lt.s32.totalorder %s9, 3
      %p113 = pnand %p111, %p112
      %p114 = pneg %p113
      // Predicated region
      $region9: #{tpu_custom_call.1} parent=5 // pred_check
        _
      $region10: #{tpu_custom_call.1} parent=5 // pred_check_branch
        %116 = sbr.rel (%p113) target = $region12
      $region11: #{tpu_custom_call.1} parent=5 // pred_region
        %s117 = ssub.s32 %s9, 1
        // Predicated region
        $region13: #{tpu_custom_call.1} parent=11 // pred_check
          %p118 = pneg %p56
        $region14: #{tpu_custom_call.1} parent=11 // pred_check_branch
          %120 = sbr.rel (%p118) target = $region16
        $region15: #{tpu_custom_call.1} parent=11 // pred_region
          _
        $region16: #{tpu_custom_call.1} parent=11 // pred_fallthru
          _
        // Predicated region
        $region17: #{tpu_custom_call.1} parent=11 // pred_check
          %p121 = pneg %p77
        $region18: #{tpu_custom_call.1} parent=11 // pred_check_branch
          %123 = sbr.rel (%p121) target = $region20
        $region19: #{tpu_custom_call.1} parent=11 // pred_region
          _
        $region20: #{tpu_custom_call.1} parent=11 // pred_fallthru
          _
      $region12: #{tpu_custom_call.1} parent=5 // pred_fallthru
        _
      %p124 = scmp.lt.s32.totalorder %s9, 2
      // Predicated region
      $region21: #{tpu_custom_call.1} parent=5 // pred_check
        %p125 = pneg %p124
      $region22: #{tpu_custom_call.1} parent=5 // pred_check_branch
        %127 = sbr.rel (%p125) target = $region24
      $region23: #{tpu_custom_call.1} parent=5 // pred_region
        // Predicated region
        $region25: #{tpu_custom_call.1} parent=23 // pred_check
          %p128 = pneg %p29
        $region26: #{tpu_custom_call.1} parent=23 // pred_check_branch
          %130 = sbr.rel (%p128) target = $region28
        $region27: #{tpu_custom_call.1} parent=23 // pred_region
          %s131 = smul.u32 2, %s9
          %s132 = ssub.s32 3, %s131
          %p133 = scmp.lt.s32.totalorder %s132, 2
          %s134 = scalar_select %p133, %s132, 2
          %s135 = smul.u32 128, %s134
          %p136 = scmp.lt.s32.totalorder %s131, 2
          %s137 = scalar_select %p136, %s131, 2
          %s138 = smul.addr %s137, 8
          %s139 = scalar_lea.vmem %s0, %s138
          %s140 = smul.u32 2, %s9
          %s141 = ssub.s32 3, %s140
          %p142 = scmp.lt.s32.totalorder %s141, 2
          %s143 = scalar_select %p142, %s141, 2
          %s144 = smul.u32 128, %s143
        $region28: #{tpu_custom_call.1} parent=23 // pred_fallthru
          _
      $region24: #{tpu_custom_call.1} parent=5 // pred_fallthru
        _
      %p145 = scmp.le.s32.totalorder 1, %s9
      %p146 = scmp.lt.s32.totalorder %s9, 3
      %p147 = pnand %p145, %p146
      %p148 = pneg %p147
      // Predicated region
      $region29: #{tpu_custom_call.1} parent=5 // pred_check
        _
      $region30: #{tpu_custom_call.1} parent=5 // pred_check_branch
        %150 = sbr.rel (%p147) target = $region32
      $region31: #{tpu_custom_call.1} parent=5 // pred_region
        %s151 = ssub.s32 %s9, 1
        %s152 = smul.u32 2, %s14
        %s153 = ssub.s32 3, %s152
        %p154 = scmp.lt.s32.totalorder %s153, 2
        %s155 = scalar_select %p154, %s153, 2
        %s156 = smul.u32 128, %s155
        %p157 = scmp.lt.s32.totalorder %s152, 2
        %s158 = scalar_select %p157, %s152, 2
        %s159 = smul.addr %s158, 8
        %s160 = scalar_lea.vmem %s0, %s159
        %p161 = pneg %p35
        %p162 = pneg %p32
        %p163 = pneg %p56
        %p164 = pneg %p53
        %p165 = pneg %p77
        %p166 = pneg %p74
        %p167 = pneg %p103
        %p168 = pneg %p100
        %s169 = sand.u32 %s90, 1
        %s170 = sand.u32 %s90, 1
        %s171 = smul.addr %s170, 16
        %s172 = scalar_lea.vmem [#allocation2], %s171
        %s173 = smul.u32 2, %s14
        %s174 = ssub.s32 3, %s173
        %p175 = scmp.lt.s32.totalorder %s174, 2
        %s176 = scalar_select %p175, %s174, 2
        %s177 = smul.u32 128, %s176
        %p178 = scmp.lt.s32.totalorder %s173, 2
        %s179 = scalar_select %p178, %s173, 2
        %s180 = smul.addr %s179, 8
        %s181 = scalar_lea.vmem %s0, %s180
        %s182 = smul.u32 2, %s14
        %s183 = ssub.s32 3, %s182
        %p184 = scmp.lt.s32.totalorder %s183, 2
        %s185 = scalar_select %p184, %s183, 2
        %s186 = smul.u32 128, %s185
        %s187 = smul.u32 2, %s14
        %s188 = ssub.s32 3, %s187
        %p189 = scmp.lt.s32.totalorder %s188, 2
        %s190 = scalar_select %p189, %s188, 2
        %s191 = smul.u32 128, %s190
        %v192 = vld [vmem:[%s181] sm:$0xff]
        %v193 = vld [vmem:[%s181 + $0x8] sm:$0xff]
        %v194 = vld [vmem:[%s1] sm:$0xff]
        %v195 = vld [vmem:[%s1 + $0x8] sm:$0xff]
        %v196 = vld [vmem:[%s1 + $0x10] sm:$0xff]
        %v197 = vld [vmem:[%s1 + $0x18] sm:$0xff]
        %v198 = vld [vmem:[%s1 + $0x20] sm:$0xff]
        %v199 = vld [vmem:[%s1 + $0x28] sm:$0xff]
        %v200 = vld [vmem:[%s1 + $0x30] sm:$0xff]
        %v201 = vld [vmem:[%s1 + $0x38] sm:$0xff]
        %v202 = vld [vmem:[%s2] sm:$0x1]
        %v204 = vlaneseq
        %v205 = vshrl.u32 %v204, 7
        %v206 = vsub.s32 0, %v205
        %v207 = vrot.slane %v202, %v206
        %vm209 = vcmask 523264
        %v211 = vsel %vm209, %v192, 0
        %v214 = vsel %vm209, %v193, 0
        %216 = vmatprep.subr.mxu0 0.0
        %217 = vmatpush1.msra.mxu0 %v194
        %218 = vmatprep.subr.mxu0 0.0
        %219 = vmatpush1.msra.mxu0 %v195
        %220 = vmatprep.subr.mxu0 0.0
        %221 = vmatpush1.msra.mxu0 %v196
        %222 = vmatprep.subr.mxu0 0.0
        %223 = vmatpush1.msra.mxu0 %v197
        %224 = vmatprep.subr.mxu0 0.0
        %225 = vmatpush1.msra.mxu0 %v198
        %226 = vmatprep.subr.mxu0 0.0
        %227 = vmatpush1.msra.mxu0 %v199
        %228 = vmatprep.subr.mxu0 0.0
        %229 = vmatpush1.msra.mxu0 %v200
        %230 = vmatprep.subr.mxu0 0.0
        %231 = vmatpush1.msra.mxu0 %v201
        %232 = vmatprep.subr.mxu0 0.0
        %233 = vmatpush1.msra.mxu0 0.0
        %234 = vmatprep.subr.mxu0 0.0
        %235 = vmatpush1.msra.mxu0 0.0
        %236 = vmatprep.subr.mxu0 0.0
        %237 = vmatpush1.msra.mxu0 0.0
        %238 = vmatprep.subr.mxu0 0.0
        %239 = vmatpush1.msra.mxu0 0.0
        %240 = vmatprep.subr.mxu0 0.0
        %241 = vmatpush1.msra.mxu0 0.0
        %242 = vmatprep.subr.mxu0 0.0
        %243 = vmatpush1.msra.mxu0 0.0
        %244 = vmatprep.subr.mxu0 0.0
        %245 = vmatpush1.msra.mxu0 0.0
        %246 = vmatprep.subr.mxu0 0.0
        %247 = vmatpush1.msra.mxu0 0.0
        %248 = vmatprep.subr.mxu0 0.0
        %249 = vmatpush1.msra.mxu0 0.0
        %250 = vmatprep.subr.mxu0 0.0
        %251 = vmatpush1.msra.mxu0 0.0
        %252 = vmatprep.subr.mxu0 0.0
        %253 = vmatpush1.msra.mxu0 0.0
        %254 = vmatprep.subr.mxu0 0.0
        %255 = vmatpush1.msra.mxu0 0.0
        %256 = vmatprep.subr.mxu0 0.0
        %257 = vmatpush1.msra.mxu0 0.0
        %258 = vmatprep.subr.mxu0 0.0
        %259 = vmatpush1.msra.mxu0 0.0
        %260 = vmatprep.subr.mxu0 0.0
        %261 = vmatpush1.msra.mxu0 0.0
        %262 = vmatprep.subr.mxu0 0.0
        %263 = vmatpush1.msra.mxu0 0.0
        %264 = vmatprep.subr.mxu0 0.0
        %265 = vmatpush1.msra.mxu0 0.0
        %266 = vmatprep.subr.mxu0 0.0
        %267 = vmatpush1.msra.mxu0 0.0
        %268 = vmatprep.subr.mxu0 0.0
        %269 = vmatpush1.msra.mxu0 0.0
        %270 = vmatprep.subr.mxu0 0.0
        %271 = vmatpush1.msra.mxu0 0.0
        %272 = vmatprep.subr.mxu0 0.0
        %273 = vmatpush1.msra.mxu0 0.0
        %274 = vmatprep.subr.mxu0 0.0
        %275 = vmatpush1.msra.mxu0 0.0
        %276 = vmatprep.subr.mxu0 0.0
        %277 = vmatpush1.msra.mxu0 0.0
        %278 = vmatprep.subr.mxu0 0.0
        %279 = vmatpush1.msra.mxu0 0.0
        %280 = vmatprep.mubr.f32.mxu0 0.0
        %281 = vmatmul.mubr.f32.gmra.mrb[0].mxu0 %v211
        %v282 = vpop.f32.mrb[0].mxu0
        %v283 = vadd.f32 %v207, %v282
        %v284 = vpop.f32.mrb[0].mxu0
        %285 = vmatprep.mubr.f32.mxu0 0.0
        %286 = vmatmul.mubr.f32.gmra.mrb[0].mxu0 %v214
        %v287 = vpop.f32.mrb[0].mxu0
        %v288 = vadd.f32 %v207, %v287
        %v289 = vpop.f32.mrb[0].mxu0
        %290 = vdwg.mxu0
        %v291 = vmax.f32 %v283, 0.0
        %v292 = vmax.f32 %v288, 0.0
        %vm293 = vcmask 64512
        %294 = vst.msk [vmem:[%s172] sm:$0xff] %vm293, %v291
        %295 = vst.msk [vmem:[%s172 + $0x8] sm:$0xff] %vm293, %v292
        %s296 = sand.u32 %s90, 1
        %s297 = sand.u32 %s90, 1
        %s298 = smul.addr %s297, 16
        %s299 = scalar_lea.vmem [#allocation2], %s298
        // Predicated region
        $region33: #{tpu_custom_call.1} parent=31 // pred_check
          %p300 = pneg %p100
        $region34: #{tpu_custom_call.1} parent=31 // pred_check_branch
          %302 = sbr.rel (%p300) target = $region36
        $region35: #{tpu_custom_call.1} parent=31 // pred_region
          %s303 = smul.u32 2, %s14
          %s304 = ssub.s32 3, %s303
          %p305 = scmp.lt.s32.totalorder %s304, 2
          %s306 = scalar_select %p305, %s304, 2
          %s307 = smul.u32 128, %s306
          %p308 = scmp.ne.s32.totalorder 0, %s307
          %s309 = smul.addr %s303, 8
          %s310 = scalar_lea.vmem %s3, %s309
          // Predicated region
          $region37: #{tpu_custom_call.1} parent=35 // pred_check
            %p311 = pneg %p308
          $region38: #{tpu_custom_call.1} parent=35 // pred_check_branch
            %313 = sbr.rel (%p311) target = $region40
          $region39: #{tpu_custom_call.1} parent=35 // pred_region
            // Predicated region
            $region41: #{tpu_custom_call.1} parent=39 // pred_check
              _
            $region42: #{tpu_custom_call.1} parent=39 // pred_check_branch
              %315 = sbr.rel (0) target = $region44
            $region43: #{tpu_custom_call.1} parent=39 // pred_region
              // Predicated region
              $region63: #{tpu_custom_call.1} parent=43 // pred_check
                _
              $region64: #{tpu_custom_call.1} parent=43 // pred_check_branch
                %366 = sbr.rel (0) target = $region66
              $region65: #{tpu_custom_call.1} parent=43 // pred_region
                %s367 = sshrl.u32 %s306, 1
                // While loop
                $region67: #{tpu_custom_call.1} parent=65 // loop_pre_header
                  _
                $region68: #{tpu_custom_call.1} parent=65 // loop_header
                  %s369 = sphi 0, %s371
                  %p370 = scmp.ge.s32.totalorder %s369, %s367
                  %s374 = sphi 0, %s383
                  %s375 = sphi %s299, %s386
                  %s376 = sphi %s310, %s387
                $region69: #{tpu_custom_call.1} parent=65 // loop_header_branch
                  %373 = sbr.rel (%p370) target = $region73
                $region70: #{tpu_custom_call.1} parent=65 // loop_body
                  %v377 = vld [vmem:[%s375] sm:$0xff]
                  %378 = vst [vmem:[%s376] sm:$0xff] %v377
                  %v379 = vld [vmem:[%s375 + $0x8] sm:$0xff]
                  %380 = vst [vmem:[%s376 + $0x8] sm:$0xff] %v379
                  %s381 = sadd.s32 1, %s374
                  %p382 = scmp.ge.s32.totalorder %s381, %s367
                  %s383 = scalar_select %p382, 0, %s381
                  %s384 = smul.u32 %s383, 16
                  %s385 = smul.u32 %s383, 16
                  %s386 = scalar_lea.vmem %s299, %s384 [#allocation2]
                  %s387 = scalar_lea.vmem %s310, %s385
                $region71: #{tpu_custom_call.1} parent=65 // loop_footer
                  %s371 = sadd.s32 %s369, 1
                $region72: #{tpu_custom_call.1} parent=65 // loop_footer_branch
                  %368 = sbr.rel target = $region68
                $region73: #{tpu_custom_call.1} parent=65 // loop_exit
                  _
                %s388 = sshrl.u32 %s306, 1
                %s389 = sand.u32 %s306, 1
                %s390 = smul.u32 %s388, 2
                %s391 = smul.u32 8, %s390
                %s392 = scalar_lea.vmem %s299, %s391 [#allocation2]
                %s393 = smul.u32 8, %s390
                %s394 = scalar_lea.vmem %s310, %s393
                // While loop
                $region74: #{tpu_custom_call.1} parent=65 // loop_pre_header
                  _
                $region75: #{tpu_custom_call.1} parent=65 // loop_header
                  %s396 = sphi 0, %s398
                  %p397 = scmp.ge.s32.totalorder %s396, %s389
                  %s401 = sphi 0, %s408
                  %s402 = sphi %s392, %s411
                  %s403 = sphi %s394, %s412
                $region76: #{tpu_custom_call.1} parent=65 // loop_header_branch
                  %400 = sbr.rel (%p397) target = $region80
                $region77: #{tpu_custom_call.1} parent=65 // loop_body
                  %v404 = vld [vmem:[%s402] sm:$0xff]
                  %405 = vst [vmem:[%s403] sm:$0xff] %v404
                  %s406 = sadd.s32 1, %s401
                  %p407 = scmp.ge.s32.totalorder %s406, %s389
                  %s408 = scalar_select %p407, 0, %s406
                  %s409 = smul.u32 %s408, 8
                  %s410 = smul.u32 %s408, 8
                  %s411 = scalar_lea.vmem %s392, %s409 [#allocation2]
                  %s412 = scalar_lea.vmem %s394, %s410
                $region78: #{tpu_custom_call.1} parent=65 // loop_footer
                  %s398 = sadd.s32 %s396, 1
                $region79: #{tpu_custom_call.1} parent=65 // loop_footer_branch
                  %395 = sbr.rel target = $region75
                $region80: #{tpu_custom_call.1} parent=65 // loop_exit
                  _
              $region66: #{tpu_custom_call.1} parent=43 // pred_fallthru
                _
              // Predicated region
              $region81: #{tpu_custom_call.1} parent=43 // pred_check
                _
              $region82: #{tpu_custom_call.1} parent=43 // pred_check_branch
                %414 = sbr.rel target = $region84
              $region83: #{tpu_custom_call.1} parent=43 // pred_region
                _
              $region84: #{tpu_custom_call.1} parent=43 // pred_fallthru
                _
            $region44: #{tpu_custom_call.1} parent=39 // pred_fallthru
              _
            // Predicated region
            $region45: #{tpu_custom_call.1} parent=39 // pred_check
              _
            $region46: #{tpu_custom_call.1} parent=39 // pred_check_branch
              %317 = sbr.rel target = $region48
            $region47: #{tpu_custom_call.1} parent=39 // pred_region
              %s319 = sshrl.u32 %s306, 1
              // While loop
              $region49: #{tpu_custom_call.1} parent=47 // loop_pre_header
                _
              $region50: #{tpu_custom_call.1} parent=47 // loop_header
                %s321 = sphi 0, %s323
                %p322 = scmp.ge.s32.totalorder %s321, %s319
                %s326 = sphi 0, %s335
                %s327 = sphi %s299, %s338
                %s328 = sphi %s310, %s339
              $region51: #{tpu_custom_call.1} parent=47 // loop_header_branch
                %325 = sbr.rel (%p322) target = $region55
              $region52: #{tpu_custom_call.1} parent=47 // loop_body
                %v329 = vld [vmem:[%s327] sm:$0xff]
                %330 = vst [vmem:[%s328] sm:$0xff] %v329
                %v331 = vld [vmem:[%s327 + $0x8] sm:$0xff]
                %332 = vst [vmem:[%s328 + $0x8] sm:$0xff] %v331
                %s333 = sadd.s32 1, %s326
                %p334 = scmp.ge.s32.totalorder %s333, %s319
                %s335 = scalar_select %p334, 0, %s333
                %s336 = smul.u32 %s335, 16
                %s337 = smul.u32 %s335, 16
                %s338 = scalar_lea.vmem %s299, %s336 [#allocation2]
                %s339 = scalar_lea.vmem %s310, %s337
              $region53: #{tpu_custom_call.1} parent=47 // loop_footer
                %s323 = sadd.s32 %s321, 1
              $region54: #{tpu_custom_call.1} parent=47 // loop_footer_branch
                %320 = sbr.rel target = $region50
              $region55: #{tpu_custom_call.1} parent=47 // loop_exit
                _
              %s340 = sshrl.u32 %s306, 1
              %s341 = sand.u32 %s306, 1
              %s342 = smul.u32 %s340, 2
              %s343 = smul.u32 8, %s342
              %s344 = scalar_lea.vmem %s299, %s343 [#allocation2]
              %s345 = smul.u32 8, %s342
              %s346 = scalar_lea.vmem %s310, %s345
              // While loop
              $region56: #{tpu_custom_call.1} parent=47 // loop_pre_header
                _
              $region57: #{tpu_custom_call.1} parent=47 // loop_header
                %s348 = sphi 0, %s350
                %p349 = scmp.ge.s32.totalorder %s348, %s341
                %s353 = sphi 0, %s360
                %s354 = sphi %s344, %s363
                %s355 = sphi %s346, %s364
              $region58: #{tpu_custom_call.1} parent=47 // loop_header_branch
                %352 = sbr.rel (%p349) target = $region62
              $region59: #{tpu_custom_call.1} parent=47 // loop_body
                %v356 = vld [vmem:[%s354] sm:$0xff]
                %357 = vst [vmem:[%s355] sm:$0xff] %v356
                %s358 = sadd.s32 1, %s353
                %p359 = scmp.ge.s32.totalorder %s358, %s341
                %s360 = scalar_select %p359, 0, %s358
                %s361 = smul.u32 %s360, 8
                %s362 = smul.u32 %s360, 8
                %s363 = scalar_lea.vmem %s344, %s361 [#allocation2]
                %s364 = scalar_lea.vmem %s346, %s362
              $region60: #{tpu_custom_call.1} parent=47 // loop_footer
                %s350 = sadd.s32 %s348, 1
              $region61: #{tpu_custom_call.1} parent=47 // loop_footer_branch
                %347 = sbr.rel target = $region57
              $region62: #{tpu_custom_call.1} parent=47 // loop_exit
                _
            $region48: #{tpu_custom_call.1} parent=39 // pred_fallthru
              _
          $region40: #{tpu_custom_call.1} parent=35 // pred_fallthru
            _
          %415 = vnop
        $region36: #{tpu_custom_call.1} parent=31 // pred_fallthru
          _
      $region32: #{tpu_custom_call.1} parent=5 // pred_fallthru
        _
      %p416 = scmp.le.s32.totalorder 2, %s9
      // Predicated region
      $region85: #{tpu_custom_call.1} parent=5 // pred_check
        %p417 = pneg %p416
      $region86: #{tpu_custom_call.1} parent=5 // pred_check_branch
        %419 = sbr.rel (%p417) target = $region88
      $region87: #{tpu_custom_call.1} parent=5 // pred_region
        %s420 = ssub.s32 %s9, 2
        // Predicated region
        $region89: #{tpu_custom_call.1} parent=87 // pred_check
          %p421 = pneg %p106
        $region90: #{tpu_custom_call.1} parent=87 // pred_check_branch
          %423 = sbr.rel (%p421) target = $region92
        $region91: #{tpu_custom_call.1} parent=87 // pred_region
          %s424 = sand.u32 %s91, 1
          %s425 = sand.u32 %s91, 1
          %s426 = smul.addr %s425, 16
          %s427 = scalar_lea.vmem [#allocation2], %s426
        $region92: #{tpu_custom_call.1} parent=87 // pred_fallthru
          _
      $region88: #{tpu_custom_call.1} parent=5 // pred_fallthru
        _
    $region6: #{tpu_custom_call.1} parent=1 // loop_footer
      %s13 = sadd.s32 1, %s9
    $region7: #{tpu_custom_call.1} parent=1 // loop_footer_branch
      %8 = sbr.rel target = $region3
    $region8: #{tpu_custom_call.1} parent=1 // loop_exit
      _

</llo_original>
